<compile_context>
chip_gen: v7x
topology: tpu7x:2x2x1
jax: 0.10.0
libtpu: 0.0.40
codegen_flags: <defaults>
</compile_context>

<pallas_src>
import functools

import jax
import jax.numpy as jnp
from jax.experimental import pallas as pl
from jax.experimental.pallas import tpu as pltpu


def _round_up(n: int, m: int) -> int:
    return ((n + m - 1) // m) * m


def _make_dynamics_kernel(L1: float, L2: float, g: float):
    """Returns a Pallas kernel body with the physical constants baked in."""
    inv_L1 = 1.0 / L1
    inv_L2 = 1.0 / L2

    def kernel(x_ref, o_ref):
        # x_ref block is (4, T): rows = [theta1, theta2, dtheta1, dtheta2],
        # T lanes of batch.  Row slices are (1, T), lane-dense.
        theta1 = x_ref[0:1, :]
        theta2 = x_ref[1:2, :]
        dtheta1 = x_ref[2:3, :]
        dtheta2 = x_ref[3:4, :]

        # 4 transcendentals total (EUP slot is the scarce resource).
        s1 = jnp.sin(theta1)
        c1 = jnp.cos(theta1)
        s2 = jnp.sin(theta2)
        c2 = jnp.cos(theta2)

        # Derived angles via exact identities (VALU ops ride in idle slots).
        sin_delta = s1 * c2 - c1 * s2          # sin(theta1 - theta2)
        cos_delta = c1 * c2 + s1 * s2          # cos(theta1 - theta2)
        cos_2delta = 2.0 * cos_delta * cos_delta - 1.0   # cos(2*(theta1-theta2))
        sin_t1_m_2t2 = sin_delta * c2 - cos_delta * s2   # sin(theta1 - 2*theta2)

        D = 2.0 - cos_2delta + 1e-06
        # One approx reciprocal on the EUP + one Newton refinement step
        # (keeps accuracy at ~1 ULP; D >= 1 so this is numerically safe).
        inv_D = pl.reciprocal(D, approx=True)
        inv_D = inv_D * (2.0 - D * inv_D)

        w1 = dtheta1 * dtheta1 * L1
        w2 = dtheta2 * dtheta2 * L2

        num1 = (-g * (2.0 * s1 + sin_t1_m_2t2)
                - 2.0 * sin_delta * (w2 + w1 * cos_delta))
        num2 = 2.0 * sin_delta * (w1 + g * c1 + w2 * cos_delta)

        # Direct lane-dense row stores (no concatenate / masked partial stores).
        o_ref[0:1, :] = dtheta1
        o_ref[1:2, :] = dtheta2
        o_ref[2:3, :] = num1 * (inv_D * inv_L1)
        o_ref[3:4, :] = num2 * (inv_D * inv_L2)

    return kernel


@functools.partial(jax.jit, static_argnames=("L1", "L2", "g", "max_tile"))
def double_pendulum_dynamics(t, x, *, L1=1.0, L2=1.0, g=9.81, max_tile=8192):
    """Pallas-backed equivalent of DoublePendulum2DPolarDynamics.forward.

    Args:
      t: time (unused by the dynamics, kept for API parity).
      x: (B, 4) float32 state [theta1, theta2, dtheta1, dtheta2].
    Returns:
      (B, 4) float32 dxdt = [dtheta1, dtheta2, ddtheta1, ddtheta2].
    """
    del t  # dynamics are time-invariant
    B, S = x.shape
    assert S == 4, "state dimension must be 4"

    # Lane tile: multiple of 128, capped so (4, T) blocks stay tiny in VMEM
    # (a few hundred KB even double-buffered -> fits v5e/v6e/v7x defaults).
    T = min(int(max_tile), _round_up(B, 128))
    padded_B = _round_up(B, T)

    # Batch-on-lanes layout: (B, 4) -> (4, B), pad lanes to a tile multiple.
    xt = x.T
    if padded_B != B:
        xt = jnp.pad(xt, ((0, 0), (0, padded_B - B)))

    kernel = _make_dynamics_kernel(float(L1), float(L2), float(g))

    out_t = pl.pallas_call(
        kernel,
        out_shape=jax.ShapeDtypeStruct((4, padded_B), x.dtype),
        grid=(padded_B // T,),
        in_specs=[pl.BlockSpec((4, T), lambda i: (0, i))],
        out_specs=pl.BlockSpec((4, T), lambda i: (0, i)),
        compiler_params=pltpu.CompilerParams(
            dimension_semantics=("parallel",)),
    )(xt)

    return out_t[:, :B].T


def _reference_jax(t, x, L1=1.0, L2=1.0, g=9.81):
    """Pure-JAX reference mirroring the PyTorch forward, for verification."""
    del t
    theta1 = x[:, 0:1]
    theta2 = x[:, 1:2]
    dtheta1 = x[:, 2:3]
    dtheta2 = x[:, 3:4]
    delta = theta1 - theta2
    D = 2.0 - jnp.cos(2.0 * theta1 - 2.0 * theta2) + 1e-06
    ddtheta1 = (
        -g * (2.0 * jnp.sin(theta1) + jnp.sin(theta1 - 2.0 * theta2))
        - 2.0 * jnp.sin(delta)
        * (dtheta2 ** 2 * L2 + dtheta1 ** 2 * L1 * jnp.cos(delta))
    ) / (L1 * D)
    ddtheta2 = (
        2.0 * jnp.sin(delta)
        * (dtheta1 ** 2 * L1 + g * jnp.cos(theta1)
           + dtheta2 ** 2 * L2 * jnp.cos(delta))
    ) / (L2 * D)
    return jnp.concatenate([dtheta1, dtheta2, ddtheta1, ddtheta2], axis=1)


if __name__ == "__main__":
    key = jax.random.PRNGKey(0)
    t = jnp.float32(0.0)

    # Small batch (module-consistent test shape): exercises the padded-tile path.
    B = 8
    x_small = jax.random.normal(key, (B, 4), dtype=jnp.float32)
    dxdt = jax.block_until_ready(double_pendulum_dynamics(t, x_small))
    ref = _reference_jax(t, x_small)
    assert dxdt.shape == (B, 4)
    assert dxdt.dtype == jnp.float32
    assert jnp.allclose(dxdt, ref, atol=1e-4, rtol=1e-4), "mismatch vs reference (B=8)"

    # Modest batch that is not a multiple of the tile: exercises grid > 1 + padding.
    B2 = 1000
    x_big = jax.random.normal(jax.random.PRNGKey(1), (B2, 4), dtype=jnp.float32)
    dxdt2 = jax.block_until_ready(
        double_pendulum_dynamics(t, x_big, max_tile=256))
    ref2 = _reference_jax(t, x_big)
    assert dxdt2.shape == (B2, 4)
    assert jnp.allclose(dxdt2, ref2, atol=1e-4, rtol=1e-4), "mismatch vs reference (B=1000)"

    # TODO(synk): for use inside an ODE integrator, fuse multiple RK stages into
    # one pallas_call so each launch does meaningful work per state.
    print("KERNEL_OK")
</pallas_src>

<mosaic_0001>
module attributes {stable_mosaic.version = 11 : i64} {
  func.func @kernel(%arg0: i32, %arg1: memref<4x128xf32, #tpu.memory_space<vmem>>, %arg2: memref<4x128xf32, #tpu.memory_space<vmem>>) attributes {dimension_semantics = [#tpu.dimension_semantics<parallel>], iteration_bounds = array<i64: 1>, scalar_prefetch = 0 : i64, scratch_operands = 0 : i64, tpu.core_type = #tpu.core_type<tc>, window_params = [{transform_indices = @transform_0, window_bounds = array<i64: 4, 128>}, {transform_indices = @transform_1, window_bounds = array<i64: 4, 128>}]} {
    %c0 = arith.constant 0 : index
    %c0_0 = arith.constant 0 : index
    %0 = vector.load %arg1[%c0, %c0_0] : memref<4x128xf32, #tpu.memory_space<vmem>>, vector<1x128xf32>
    %c1 = arith.constant 1 : index
    %c0_1 = arith.constant 0 : index
    %1 = vector.load %arg1[%c1, %c0_1] : memref<4x128xf32, #tpu.memory_space<vmem>>, vector<1x128xf32>
    %c2 = arith.constant 2 : index
    %c0_2 = arith.constant 0 : index
    %2 = vector.load %arg1[%c2, %c0_2] : memref<4x128xf32, #tpu.memory_space<vmem>>, vector<1x128xf32>
    %c3 = arith.constant 3 : index
    %c0_3 = arith.constant 0 : index
    %3 = vector.load %arg1[%c3, %c0_3] : memref<4x128xf32, #tpu.memory_space<vmem>>, vector<1x128xf32>
    %4 = math.sin %0 : vector<1x128xf32>
    %5 = math.cos %0 : vector<1x128xf32>
    %6 = math.sin %1 : vector<1x128xf32>
    %7 = math.cos %1 : vector<1x128xf32>
    %8 = arith.mulf %4, %7 : vector<1x128xf32>
    %9 = arith.mulf %5, %6 : vector<1x128xf32>
    %10 = arith.subf %8, %9 : vector<1x128xf32>
    %11 = arith.mulf %5, %7 : vector<1x128xf32>
    %12 = arith.mulf %4, %6 : vector<1x128xf32>
    %13 = arith.addf %11, %12 : vector<1x128xf32>
    %cst = arith.constant 2.000000e+00 : f32
    %14 = vector.broadcast %cst : f32 to vector<1x128xf32>
    %15 = arith.mulf %14, %13 : vector<1x128xf32>
    %16 = arith.mulf %15, %13 : vector<1x128xf32>
    %cst_4 = arith.constant 1.000000e+00 : f32
    %17 = vector.broadcast %cst_4 : f32 to vector<1x128xf32>
    %18 = arith.subf %16, %17 : vector<1x128xf32>
    %19 = arith.mulf %10, %7 : vector<1x128xf32>
    %20 = arith.mulf %13, %6 : vector<1x128xf32>
    %21 = arith.subf %19, %20 : vector<1x128xf32>
    %cst_5 = arith.constant 2.000000e+00 : f32
    %22 = vector.broadcast %cst_5 : f32 to vector<1x128xf32>
    %23 = arith.subf %22, %18 : vector<1x128xf32>
    %cst_6 = arith.constant 9.99999997E-7 : f32
    %24 = vector.broadcast %cst_6 : f32 to vector<1x128xf32>
    %25 = arith.addf %23, %24 : vector<1x128xf32>
    %26 = tpu.reciprocal %25 {approx = true} : vector<1x128xf32> -> vector<1x128xf32>
    %27 = arith.mulf %25, %26 : vector<1x128xf32>
    %cst_7 = arith.constant 2.000000e+00 : f32
    %28 = vector.broadcast %cst_7 : f32 to vector<1x128xf32>
    %29 = arith.subf %28, %27 : vector<1x128xf32>
    %30 = arith.mulf %26, %29 : vector<1x128xf32>
    %31 = arith.mulf %2, %2 : vector<1x128xf32>
    %cst_8 = arith.constant 1.000000e+00 : f32
    %32 = vector.broadcast %cst_8 : f32 to vector<1x128xf32>
    %33 = arith.mulf %31, %32 : vector<1x128xf32>
    %34 = arith.mulf %3, %3 : vector<1x128xf32>
    %cst_9 = arith.constant 1.000000e+00 : f32
    %35 = vector.broadcast %cst_9 : f32 to vector<1x128xf32>
    %36 = arith.mulf %34, %35 : vector<1x128xf32>
    %cst_10 = arith.constant 2.000000e+00 : f32
    %37 = vector.broadcast %cst_10 : f32 to vector<1x128xf32>
    %38 = arith.mulf %37, %4 : vector<1x128xf32>
    %39 = arith.addf %38, %21 : vector<1x128xf32>
    %cst_11 = arith.constant -9.810000e+00 : f32
    %40 = vector.broadcast %cst_11 : f32 to vector<1x128xf32>
    %41 = arith.mulf %40, %39 : vector<1x128xf32>
    %cst_12 = arith.constant 2.000000e+00 : f32
    %42 = vector.broadcast %cst_12 : f32 to vector<1x128xf32>
    %43 = arith.mulf %42, %10 : vector<1x128xf32>
    %44 = arith.mulf %33, %13 : vector<1x128xf32>
    %45 = arith.addf %36, %44 : vector<1x128xf32>
    %46 = arith.mulf %43, %45 : vector<1x128xf32>
    %47 = arith.subf %41, %46 : vector<1x128xf32>
    %cst_13 = arith.constant 2.000000e+00 : f32
    %48 = vector.broadcast %cst_13 : f32 to vector<1x128xf32>
    %49 = arith.mulf %48, %10 : vector<1x128xf32>
    %cst_14 = arith.constant 9.810000e+00 : f32
    %50 = vector.broadcast %cst_14 : f32 to vector<1x128xf32>
    %51 = arith.mulf %50, %5 : vector<1x128xf32>
    %52 = arith.addf %33, %51 : vector<1x128xf32>
    %53 = arith.mulf %36, %13 : vector<1x128xf32>
    %54 = arith.addf %52, %53 : vector<1x128xf32>
    %55 = arith.mulf %49, %54 : vector<1x128xf32>
    %c0_15 = arith.constant 0 : index
    %c0_16 = arith.constant 0 : index
    %56 = vector.load %arg2[%c0_15, %c0_16] : memref<4x128xf32, #tpu.memory_space<vmem>>, vector<1x128xf32>
    tpu.vector_store %arg2[%c0_15, %c0_16], %2 {strides = array<i32>} : memref<4x128xf32, #tpu.memory_space<vmem>>, vector<1x128xf32>,
    %c1_17 = arith.constant 1 : index
    %c0_18 = arith.constant 0 : index
    %57 = vector.load %arg2[%c1_17, %c0_18] : memref<4x128xf32, #tpu.memory_space<vmem>>, vector<1x128xf32>
    tpu.vector_store %arg2[%c1_17, %c0_18], %3 {strides = array<i32>} : memref<4x128xf32, #tpu.memory_space<vmem>>, vector<1x128xf32>,
    %cst_19 = arith.constant 1.000000e+00 : f32
    %58 = vector.broadcast %cst_19 : f32 to vector<1x128xf32>
    %59 = arith.mulf %30, %58 : vector<1x128xf32>
    %60 = arith.mulf %47, %59 : vector<1x128xf32>
    %c2_20 = arith.constant 2 : index
    %c0_21 = arith.constant 0 : index
    %61 = vector.load %arg2[%c2_20, %c0_21] : memref<4x128xf32, #tpu.memory_space<vmem>>, vector<1x128xf32>
    tpu.vector_store %arg2[%c2_20, %c0_21], %60 {strides = array<i32>} : memref<4x128xf32, #tpu.memory_space<vmem>>, vector<1x128xf32>,
    %cst_22 = arith.constant 1.000000e+00 : f32
    %62 = vector.broadcast %cst_22 : f32 to vector<1x128xf32>
    %63 = arith.mulf %30, %62 : vector<1x128xf32>
    %64 = arith.mulf %55, %63 : vector<1x128xf32>
    %c3_23 = arith.constant 3 : index
    %c0_24 = arith.constant 0 : index
    %65 = vector.load %arg2[%c3_23, %c0_24] : memref<4x128xf32, #tpu.memory_space<vmem>>, vector<1x128xf32>
    tpu.vector_store %arg2[%c3_23, %c0_24], %64 {strides = array<i32>} : memref<4x128xf32, #tpu.memory_space<vmem>>, vector<1x128xf32>,
    return
  }
  func.func @transform_0(%arg0: i32) -> (i32, i32) {
    %c0_i32 = arith.constant 0 : i32
    %c0_i32_0 = arith.constant 0 : i32
    return %c0_i32, %arg0 : i32, i32
  }
  func.func @transform_1(%arg0: i32) -> (i32, i32) {
    %c0_i32 = arith.constant 0 : i32
    %c0_i32_0 = arith.constant 0 : i32
    return %c0_i32, %arg0 : i32, i32
  }
}

</mosaic_0001>

<llo_original>
// kernel: double_pendulum_dynamics.1
$region0: #{double_pendulum_dynamics.1}
  #allocation0 [shape = 'u32[]', space=smem, size = 0x4, offset = 0x4, fixed_abs, tag = 'smem constant byte address 0x4 - core index']
  #allocation1 [shape = 'u32[144,128]{1,0:T(1,128)}', space=vmem, size = 0x12000, scoped, tag = 'internal scratch']
  %s0 = inlined_call_operand.vmem [shape: f32[4,128], index: 0, kind: input, shape index: {}]
  %s1 = inlined_call_operand.vmem [shape: f32[4,128], index: 1, kind: output, shape index: {}]
  %s2 = sld [smem:[#allocation0]]
  $region14: #{double_pendulum_dynamics.1} parent=0
    _
  %s4 = ssub.s32 1, %s2
  %s5 = scalar_select 0, %s4, %s2
  // Predicated region
  $region2: #{double_pendulum_dynamics.1} parent=0 // pred_check
    _
  $region3: #{double_pendulum_dynamics.1} parent=0 // pred_check_branch
    %7 = sbr.rel (0) target = $region5
  $region4: #{double_pendulum_dynamics.1} parent=0 // pred_region
    _
  $region5: #{double_pendulum_dynamics.1} parent=0 // pred_fallthru
    _
  %v8 = vld [vmem:[%s0] sm:$0x1]
  %v9 = vld [vmem:[%s0 + $0x1] sm:$0x1]
  %v10 = vld [vmem:[%s0 + $0x2] sm:$0x1]
  %v11 = vld [vmem:[%s0 + $0x3] sm:$0x1]
  %v12 = vand.u32 2147483647, %v8
  %vm13 = vcmp.le.f32.partialorder %v12, 0.7853982
  %vm14 = vcmp.lt.s32.totalorder %v8, 0
  %v15 = vand.u32 %v8, 2139095040
  %v16 = vshrl.u32 %v15, 23
  %v17 = vsub.s32 %v16, 127
  %v18 = vand.u32 2147483647, %v8
  %v19 = vand.u32 %v18, 8388607
  %v20 = vor.u32 %v19, 8388608
  %v21 = vsub.s32 0, %v20
  %v22 = vadd.s32 %v17, 1
  %vm23 = vcmp.gt.s32.totalorder %v22, 0
  %v24 = vsel %vm23, %v22, 0
  %v25 = vshrl.u32 %v24, 5
  %v26 = vand.u32 %v24, 31
  %v27 = vsub.s32 32, %v26
  %v28 = vshrl.u32 683565275, %v27
  %v29 = vshll.u32 683565275, %v26
  %v30 = vshrl.u32 2475754826, %v27
  %v31 = vor.u32 %v29, %v30
  %v32 = vshll.u32 2475754826, %v26
  %v33 = vshrl.u32 2131351028, %v27
  %v34 = vor.u32 %v32, %v33
  %v35 = vshll.u32 2131351028, %v26
  %v36 = vshrl.u32 2102212464, %v27
  %v37 = vor.u32 %v35, %v36
  %v38 = vshll.u32 2102212464, %v26
  %v39 = vshrl.u32 920167782, %v27
  %v40 = vor.u32 %v38, %v39
  %v41 = vshll.u32 920167782, %v26
  %v42 = vshrl.u32 1326507024, %v27
  %v43 = vor.u32 %v41, %v42
  %vm44 = vcmp.lt.s32.totalorder %v25, 1
  %vm45 = vcmp.lt.s32.totalorder %v25, 2
  %vm46 = vcmp.lt.s32.totalorder %v25, 3
  %vm47 = vcmp.lt.s32.totalorder %v25, 4
  %v48 = vsel %vm44, %v28, %v31
  %v49 = vsel %vm47, %v37, 2102212464
  %v50 = vsel %vm46, %v34, %v49
  %v51 = vsel %vm45, %v48, %v50
  %v52 = vsel %vm44, %v31, %v34
  %v53 = vsel %vm47, %v40, 920167782
  %v54 = vsel %vm46, %v37, %v53
  %v55 = vsel %vm45, %v52, %v54
  %v56 = vsel %vm44, %v34, %v37
  %v57 = vsel %vm47, %v43, 1326507024
  %v58 = vsel %vm46, %v40, %v57
  %v59 = vsel %vm45, %v56, %v58
  %v60 = vshll.u32 %v20, 8
  %v61 = vmul.u32.u64.compose %v60, %v59
  %v62 = vextract.low.u32 %v61
  %v63 = vextract.high.u32 %v61
  %v64 = vmul.u32.u64.compose %v60, %v55
  %v65 = vextract.low.u32 %v64
  %v66 = vextract.high.u32 %v64
  %v67 = vmul.u32 %v60, %v51
  %v68 = vadd.s32 %v63, %v65
  %vm69 = vc.u32 %v63, %v65
  %v70 = vadd.s32 %v66, 1
  %v71 = vsel %vm69, %v70, %v66
  %v72 = vadd.s32 %v67, %v71
  %v73 = vadd.s32 %v72, 536870912
  %v74 = vshrl.u32 %v73, 30
  %v75 = vshll.u32 %v74, 30
  %v76 = vsub.s32 %v72, %v75
  %vm77 = vcmp.lt.s32.totalorder %v76, 0
  %v78 = vsub.s32 0, %v76
  %v79 = vsel %vm77, %v78, %v76
  %v80 = vclz %v79
  %v81 = vsub.s32 %v80, 2
  %vm82 = vcmp.gt.s32.totalorder 0, %v81
  %v83 = vsel %vm82, 0, %v81
  %v84 = vsub.s32 32, %v83
  %v85 = vshll.u32 %v76, %v83
  %v86 = vshrl.u32 %v68, %v84
  %v87 = vor.u32 %v85, %v86
  %v88 = vsub.s32 4294967266, %v83
  %v89 = vadd.s32 %v88, 127
  %v90 = vshll.u32 %v89, 23
  %v91 = vor.u32 4788187, %v90
  %v92 = vand.u32 2147483647, %v91
  %v94 = vcvt.s32.f32 %v87
  %v95 = vmul.f32 %v94, %v92
  %v96 = vxor.u32 %v95, 2147483648
  %v97 = vsel %vm14, %v96, %v95
  %v98 = vsub.s32 4, %v74
  %v99 = vsel %vm14, %v98, %v74
  %v100 = vsel %vm13, %v8, %v97
  %v101 = vsel %vm13, 0, %v99
  %v102 = vcosq.f32.pop %v100
  %v103 = vsinq.f32.pop %v100
  %vm104 = vweird.f32 %v8
  %v105 = vadd.s32 %v101, 3
  %v106 = vand.u32 %v105, 3
  %vm107 = vcmp.lt.s32.totalorder %v106, 2
  %vm108 = vcmp.eq.s32.totalorder %v106, 0
  %v109 = vxor.u32 %v103, 2147483648
  %v110 = vsel %vm108, %v102, %v109
  %vm111 = vcmp.eq.s32.totalorder %v106, 2
  %v112 = vxor.u32 %v102, 2147483648
  %v113 = vsel %vm111, %v112, %v103
  %v114 = vsel %vm107, %v110, %v113
  %v115 = vsel %vm104, nan, %v114
  %v116 = vand.u32 2147483647, %v8
  %vm117 = vcmp.le.f32.partialorder %v116, 0.7853982
  %vm118 = vcmp.lt.s32.totalorder %v8, 0
  %v119 = vand.u32 %v8, 2139095040
  %v120 = vshrl.u32 %v119, 23
  %v121 = vsub.s32 %v120, 127
  %v122 = vand.u32 2147483647, %v8
  %v123 = vand.u32 %v122, 8388607
  %v124 = vor.u32 %v123, 8388608
  %v125 = vsub.s32 0, %v124
  %v126 = vadd.s32 %v121, 1
  %vm127 = vcmp.gt.s32.totalorder %v126, 0
  %v128 = vsel %vm127, %v126, 0
  %v129 = vshrl.u32 %v128, 5
  %v130 = vand.u32 %v128, 31
  %v131 = vsub.s32 32, %v130
  %v132 = vshrl.u32 683565275, %v131
  %v133 = vshll.u32 683565275, %v130
  %v134 = vshrl.u32 2475754826, %v131
  %v135 = vor.u32 %v133, %v134
  %v136 = vshll.u32 2475754826, %v130
  %v137 = vshrl.u32 2131351028, %v131
  %v138 = vor.u32 %v136, %v137
  %v139 = vshll.u32 2131351028, %v130
  %v140 = vshrl.u32 2102212464, %v131
  %v141 = vor.u32 %v139, %v140
  %v142 = vshll.u32 2102212464, %v130
  %v143 = vshrl.u32 920167782, %v131
  %v144 = vor.u32 %v142, %v143
  %v145 = vshll.u32 920167782, %v130
  %v146 = vshrl.u32 1326507024, %v131
  %v147 = vor.u32 %v145, %v146
  %vm148 = vcmp.lt.s32.totalorder %v129, 1
  %vm149 = vcmp.lt.s32.totalorder %v129, 2
  %vm150 = vcmp.lt.s32.totalorder %v129, 3
  %vm151 = vcmp.lt.s32.totalorder %v129, 4
  %v152 = vsel %vm148, %v132, %v135
  %v153 = vsel %vm151, %v141, 2102212464
  %v154 = vsel %vm150, %v138, %v153
  %v155 = vsel %vm149, %v152, %v154
  %v156 = vsel %vm148, %v135, %v138
  %v157 = vsel %vm151, %v144, 920167782
  %v158 = vsel %vm150, %v141, %v157
  %v159 = vsel %vm149, %v156, %v158
  %v160 = vsel %vm148, %v138, %v141
  %v161 = vsel %vm151, %v147, 1326507024
  %v162 = vsel %vm150, %v144, %v161
  %v163 = vsel %vm149, %v160, %v162
  %v164 = vshll.u32 %v124, 8
  %v165 = vmul.u32.u64.compose %v164, %v163
  %v166 = vextract.low.u32 %v165
  %v167 = vextract.high.u32 %v165
  %v168 = vmul.u32.u64.compose %v164, %v159
  %v169 = vextract.low.u32 %v168
  %v170 = vextract.high.u32 %v168
  %v171 = vmul.u32 %v164, %v155
  %v172 = vadd.s32 %v167, %v169
  %vm173 = vc.u32 %v167, %v169
  %v174 = vadd.s32 %v170, 1
  %v175 = vsel %vm173, %v174, %v170
  %v176 = vadd.s32 %v171, %v175
  %v177 = vadd.s32 %v176, 536870912
  %v178 = vshrl.u32 %v177, 30
  %v179 = vshll.u32 %v178, 30
  %v180 = vsub.s32 %v176, %v179
  %vm181 = vcmp.lt.s32.totalorder %v180, 0
  %v182 = vsub.s32 0, %v180
  %v183 = vsel %vm181, %v182, %v180
  %v184 = vclz %v183
  %v185 = vsub.s32 %v184, 2
  %vm186 = vcmp.gt.s32.totalorder 0, %v185
  %v187 = vsel %vm186, 0, %v185
  %v188 = vsub.s32 32, %v187
  %v189 = vshll.u32 %v180, %v187
  %v190 = vshrl.u32 %v172, %v188
  %v191 = vor.u32 %v189, %v190
  %v192 = vsub.s32 4294967266, %v187
  %v193 = vadd.s32 %v192, 127
  %v194 = vshll.u32 %v193, 23
  %v195 = vor.u32 4788187, %v194
  %v196 = vand.u32 2147483647, %v195
  %v198 = vcvt.s32.f32 %v191
  %v199 = vmul.f32 %v198, %v196
  %v200 = vxor.u32 %v199, 2147483648
  %v201 = vsel %vm118, %v200, %v199
  %v202 = vsub.s32 4, %v178
  %v203 = vsel %vm118, %v202, %v178
  %v204 = vsel %vm117, %v8, %v201
  %v205 = vsel %vm117, 0, %v203
  %v206 = vcosq.f32.pop %v204
  %v207 = vsinq.f32.pop %v204
  %vm208 = vweird.f32 %v8
  %v209 = vand.u32 %v205, 3
  %vm210 = vcmp.lt.s32.totalorder %v209, 2
  %vm211 = vcmp.eq.s32.totalorder %v209, 0
  %v212 = vxor.u32 %v207, 2147483648
  %v213 = vsel %vm211, %v206, %v212
  %vm214 = vcmp.eq.s32.totalorder %v209, 2
  %v215 = vxor.u32 %v206, 2147483648
  %v216 = vsel %vm214, %v215, %v207
  %v217 = vsel %vm210, %v213, %v216
  %v218 = vsel %vm208, nan, %v217
  %v219 = vand.u32 2147483647, %v9
  %vm220 = vcmp.le.f32.partialorder %v219, 0.7853982
  %vm221 = vcmp.lt.s32.totalorder %v9, 0
  %v222 = vand.u32 %v9, 2139095040
  %v223 = vshrl.u32 %v222, 23
  %v224 = vsub.s32 %v223, 127
  %v225 = vand.u32 2147483647, %v9
  %v226 = vand.u32 %v225, 8388607
  %v227 = vor.u32 %v226, 8388608
  %v228 = vsub.s32 0, %v227
  %v229 = vadd.s32 %v224, 1
  %vm230 = vcmp.gt.s32.totalorder %v229, 0
  %v231 = vsel %vm230, %v229, 0
  %v232 = vshrl.u32 %v231, 5
  %v233 = vand.u32 %v231, 31
  %v234 = vsub.s32 32, %v233
  %v235 = vshrl.u32 683565275, %v234
  %v236 = vshll.u32 683565275, %v233
  %v237 = vshrl.u32 2475754826, %v234
  %v238 = vor.u32 %v236, %v237
  %v239 = vshll.u32 2475754826, %v233
  %v240 = vshrl.u32 2131351028, %v234
  %v241 = vor.u32 %v239, %v240
  %v242 = vshll.u32 2131351028, %v233
  %v243 = vshrl.u32 2102212464, %v234
  %v244 = vor.u32 %v242, %v243
  %v245 = vshll.u32 2102212464, %v233
  %v246 = vshrl.u32 920167782, %v234
  %v247 = vor.u32 %v245, %v246
  %v248 = vshll.u32 920167782, %v233
  %v249 = vshrl.u32 1326507024, %v234
  %v250 = vor.u32 %v248, %v249
  %vm251 = vcmp.lt.s32.totalorder %v232, 1
  %vm252 = vcmp.lt.s32.totalorder %v232, 2
  %vm253 = vcmp.lt.s32.totalorder %v232, 3
  %vm254 = vcmp.lt.s32.totalorder %v232, 4
  %v255 = vsel %vm251, %v235, %v238
  %v256 = vsel %vm254, %v244, 2102212464
  %v257 = vsel %vm253, %v241, %v256
  %v258 = vsel %vm252, %v255, %v257
  %v259 = vsel %vm251, %v238, %v241
  %v260 = vsel %vm254, %v247, 920167782
  %v261 = vsel %vm253, %v244, %v260
  %v262 = vsel %vm252, %v259, %v261
  %v263 = vsel %vm251, %v241, %v244
  %v264 = vsel %vm254, %v250, 1326507024
  %v265 = vsel %vm253, %v247, %v264
  %v266 = vsel %vm252, %v263, %v265
  %v267 = vshll.u32 %v227, 8
  %v268 = vmul.u32.u64.compose %v267, %v266
  %v269 = vextract.low.u32 %v268
  %v270 = vextract.high.u32 %v268
  %v271 = vmul.u32.u64.compose %v267, %v262
  %v272 = vextract.low.u32 %v271
  %v273 = vextract.high.u32 %v271
  %v274 = vmul.u32 %v267, %v258
  %v275 = vadd.s32 %v270, %v272
  %vm276 = vc.u32 %v270, %v272
  %v277 = vadd.s32 %v273, 1
  %v278 = vsel %vm276, %v277, %v273
  %v279 = vadd.s32 %v274, %v278
  %v280 = vadd.s32 %v279, 536870912
  %v281 = vshrl.u32 %v280, 30
  %v282 = vshll.u32 %v281, 30
  %v283 = vsub.s32 %v279, %v282
  %vm284 = vcmp.lt.s32.totalorder %v283, 0
  %v285 = vsub.s32 0, %v283
  %v286 = vsel %vm284, %v285, %v283
  %v287 = vclz %v286
  %v288 = vsub.s32 %v287, 2
  %vm289 = vcmp.gt.s32.totalorder 0, %v288
  %v290 = vsel %vm289, 0, %v288
  %v291 = vsub.s32 32, %v290
  %v292 = vshll.u32 %v283, %v290
  %v293 = vshrl.u32 %v275, %v291
  %v294 = vor.u32 %v292, %v293
  %v295 = vsub.s32 4294967266, %v290
  %v296 = vadd.s32 %v295, 127
  %v297 = vshll.u32 %v296, 23
  %v298 = vor.u32 4788187, %v297
  %v299 = vand.u32 2147483647, %v298
  %v301 = vcvt.s32.f32 %v294
  %v302 = vmul.f32 %v301, %v299
  %v303 = vxor.u32 %v302, 2147483648
  %v304 = vsel %vm221, %v303, %v302
  %v305 = vsub.s32 4, %v281
  %v306 = vsel %vm221, %v305, %v281
  %v307 = vsel %vm220, %v9, %v304
  %v308 = vsel %vm220, 0, %v306
  %v309 = vcosq.f32.pop %v307
  %v310 = vsinq.f32.pop %v307
  %vm311 = vweird.f32 %v9
  %v312 = vadd.s32 %v308, 3
  %v313 = vand.u32 %v312, 3
  %vm314 = vcmp.lt.s32.totalorder %v313, 2
  %vm315 = vcmp.eq.s32.totalorder %v313, 0
  %v316 = vxor.u32 %v310, 2147483648
  %v317 = vsel %vm315, %v309, %v316
  %vm318 = vcmp.eq.s32.totalorder %v313, 2
  %v319 = vxor.u32 %v309, 2147483648
  %v320 = vsel %vm318, %v319, %v310
  %v321 = vsel %vm314, %v317, %v320
  %v322 = vsel %vm311, nan, %v321
  %v323 = vand.u32 2147483647, %v9
  %vm324 = vcmp.le.f32.partialorder %v323, 0.7853982
  %vm325 = vcmp.lt.s32.totalorder %v9, 0
  %v326 = vand.u32 %v9, 2139095040
  %v327 = vshrl.u32 %v326, 23
  %v328 = vsub.s32 %v327, 127
  %v329 = vand.u32 2147483647, %v9
  %v330 = vand.u32 %v329, 8388607
  %v331 = vor.u32 %v330, 8388608
  %v332 = vsub.s32 0, %v331
  %v333 = vadd.s32 %v328, 1
  %vm334 = vcmp.gt.s32.totalorder %v333, 0
  %v335 = vsel %vm334, %v333, 0
  %v336 = vshrl.u32 %v335, 5
  %v337 = vand.u32 %v335, 31
  %v338 = vsub.s32 32, %v337
  %v339 = vshrl.u32 683565275, %v338
  %v340 = vshll.u32 683565275, %v337
  %v341 = vshrl.u32 2475754826, %v338
  %v342 = vor.u32 %v340, %v341
  %v343 = vshll.u32 2475754826, %v337
  %v344 = vshrl.u32 2131351028, %v338
  %v345 = vor.u32 %v343, %v344
  %v346 = vshll.u32 2131351028, %v337
  %v347 = vshrl.u32 2102212464, %v338
  %v348 = vor.u32 %v346, %v347
  %v349 = vshll.u32 2102212464, %v337
  %v350 = vshrl.u32 920167782, %v338
  %v351 = vor.u32 %v349, %v350
  %v352 = vshll.u32 920167782, %v337
  %v353 = vshrl.u32 1326507024, %v338
  %v354 = vor.u32 %v352, %v353
  %vm355 = vcmp.lt.s32.totalorder %v336, 1
  %vm356 = vcmp.lt.s32.totalorder %v336, 2
  %vm357 = vcmp.lt.s32.totalorder %v336, 3
  %vm358 = vcmp.lt.s32.totalorder %v336, 4
  %v359 = vsel %vm355, %v339, %v342
  %v360 = vsel %vm358, %v348, 2102212464
  %v361 = vsel %vm357, %v345, %v360
  %v362 = vsel %vm356, %v359, %v361
  %v363 = vsel %vm355, %v342, %v345
  %v364 = vsel %vm358, %v351, 920167782
  %v365 = vsel %vm357, %v348, %v364
  %v366 = vsel %vm356, %v363, %v365
  %v367 = vsel %vm355, %v345, %v348
  %v368 = vsel %vm358, %v354, 1326507024
  %v369 = vsel %vm357, %v351, %v368
  %v370 = vsel %vm356, %v367, %v369
  %v371 = vshll.u32 %v331, 8
  %v372 = vmul.u32.u64.compose %v371, %v370
  %v373 = vextract.low.u32 %v372
  %v374 = vextract.high.u32 %v372
  %v375 = vmul.u32.u64.compose %v371, %v366
  %v376 = vextract.low.u32 %v375
  %v377 = vextract.high.u32 %v375
  %v378 = vmul.u32 %v371, %v362
  %v379 = vadd.s32 %v374, %v376
  %vm380 = vc.u32 %v374, %v376
  %v381 = vadd.s32 %v377, 1
  %v382 = vsel %vm380, %v381, %v377
  %v383 = vadd.s32 %v378, %v382
  %v384 = vadd.s32 %v383, 536870912
  %v385 = vshrl.u32 %v384, 30
  %v386 = vshll.u32 %v385, 30
  %v387 = vsub.s32 %v383, %v386
  %vm388 = vcmp.lt.s32.totalorder %v387, 0
  %v389 = vsub.s32 0, %v387
  %v390 = vsel %vm388, %v389, %v387
  %v391 = vclz %v390
  %v392 = vsub.s32 %v391, 2
  %vm393 = vcmp.gt.s32.totalorder 0, %v392
  %v394 = vsel %vm393, 0, %v392
  %v395 = vsub.s32 32, %v394
  %v396 = vshll.u32 %v387, %v394
  %v397 = vshrl.u32 %v379, %v395
  %v398 = vor.u32 %v396, %v397
  %v399 = vsub.s32 4294967266, %v394
  %v400 = vadd.s32 %v399, 127
  %v401 = vshll.u32 %v400, 23
  %v402 = vor.u32 4788187, %v401
  %v403 = vand.u32 2147483647, %v402
  %v405 = vcvt.s32.f32 %v398
  %v406 = vmul.f32 %v405, %v403
  %v407 = vxor.u32 %v406, 2147483648
  %v408 = vsel %vm325, %v407, %v406
  %v409 = vsub.s32 4, %v385
  %v410 = vsel %vm325, %v409, %v385
  %v411 = vsel %vm324, %v9, %v408
  %v412 = vsel %vm324, 0, %v410
  %v413 = vcosq.f32.pop %v411
  %v414 = vsinq.f32.pop %v411
  %vm415 = vweird.f32 %v9
  %v416 = vand.u32 %v412, 3
  %vm417 = vcmp.lt.s32.totalorder %v416, 2
  %vm418 = vcmp.eq.s32.totalorder %v416, 0
  %v419 = vxor.u32 %v414, 2147483648
  %v420 = vsel %vm418, %v413, %v419
  %vm421 = vcmp.eq.s32.totalorder %v416, 2
  %v422 = vxor.u32 %v413, 2147483648
  %v423 = vsel %vm421, %v422, %v414
  %v424 = vsel %vm417, %v420, %v423
  %v425 = vsel %vm415, nan, %v424
  %v426 = vmul.f32 %v115, %v425
  %v427 = vmul.f32 %v218, %v322
  %v428 = vsub.f32 %v426, %v427
  %v429 = vmul.f32 %v218, %v425
  %v430 = vmul.f32 %v115, %v322
  %v431 = vadd.f32 %v429, %v430
  %v432 = vmul.f32 %v431, 2.0
  %v433 = vmul.f32 %v432, %v431
  %v434 = vsub.f32 %v433, 1.0
  %v435 = vmul.f32 %v428, %v425
  %v436 = vmul.f32 %v431, %v322
  %v437 = vsub.f32 %v435, %v436
  %v438 = vsub.f32 2.0, %v434
  %v439 = vadd.f32 %v438, 1e-06
  %v440 = vrcp.pop %v439
  %v441 = vmul.f32 %v439, %v440
  %v442 = vsub.f32 2.0, %v441
  %v443 = vmul.f32 %v440, %v442
  %v444 = vmul.f32 %v10, %v10
  %v445 = vmul.f32 %v11, %v11
  %v446 = vmul.f32 %v115, 2.0
  %v447 = vadd.f32 %v446, %v437
  %v448 = vmul.f32 %v447, -9.81
  %v449 = vmul.f32 %v428, 2.0
  %v450 = vmul.f32 %v444, %v431
  %v451 = vadd.f32 %v445, %v450
  %v452 = vmul.f32 %v449, %v451
  %v453 = vsub.f32 %v448, %v452
  %v454 = vmul.f32 %v218, 9.81
  %v455 = vadd.f32 %v444, %v454
  %v456 = vmul.f32 %v445, %v431
  %v457 = vadd.f32 %v455, %v456
  %v458 = vmul.f32 %v449, %v457
  %459 = vst [vmem:[%s1] sm:$0x1] %v10
  %460 = vst [vmem:[%s1 + $0x1] sm:$0x1] %v11
  %v461 = vmul.f32 %v453, %v443
  %462 = vst [vmem:[%s1 + $0x2] sm:$0x1] %v461
  %v463 = vmul.f32 %v458, %v443
  %464 = vst [vmem:[%s1 + $0x3] sm:$0x1] %v463
  // Predicated region
  $region6: #{double_pendulum_dynamics.1} parent=0 // pred_check
    _
  $region7: #{double_pendulum_dynamics.1} parent=0 // pred_check_branch
    %466 = sbr.rel (0) target = $region9
  $region8: #{double_pendulum_dynamics.1} parent=0 // pred_region
    _
  $region9: #{double_pendulum_dynamics.1} parent=0 // pred_fallthru
    _
  // Predicated region
  $region10: #{double_pendulum_dynamics.1} parent=0 // pred_check
    _
  $region11: #{double_pendulum_dynamics.1} parent=0 // pred_check_branch
    %468 = sbr.rel (0) target = $region13
  $region12: #{double_pendulum_dynamics.1} parent=0 // pred_region
    _
  $region13: #{double_pendulum_dynamics.1} parent=0 // pred_fallthru
    _

</llo_original>
